<compile_context>
chip_gen: v5e
topology: v5e:2x2
jax: 0.10.0
libtpu: 0.0.40
codegen_flags: <defaults>
</compile_context>

<pallas_src>
import jax
import jax.numpy as jnp
from jax.experimental import pallas as pl
from jax.experimental.pallas import tpu as pltpu

Z = 3
H = 64
OUT = 3
NEG_SLOPE = 0.01  # nn.LeakyReLU() default


def _leaky_relu(x):
    return jnp.where(x >= 0, x, NEG_SLOPE * x)


def _round_up(n, m):
    return ((n + m - 1) // m) * m


def generator_kernel(x_ref, w1_ref, b1_ref, w2_ref, b2_ref, w3_ref, b3_ref, o_ref):
    # x_ref: (Z, TB)   — batch on lanes
    # w1_ref: (H, Z), w2_ref: (H, H), w3_ref: (OUT, H)   — PyTorch (out, in)
    # b*_ref: (out, 1) — broadcast along lanes
    # o_ref: (OUT, TB)
    x = x_ref[...]
    w1 = w1_ref[...]

    # fc1: K=3 is far too small for the MXU — 3 VPU broadcast-FMAs instead.
    h1 = w1[:, 0:1] * x[0:1, :]
    h1 = h1 + w1[:, 1:2] * x[1:2, :]
    h1 = h1 + w1[:, 2:3] * x[2:3, :]
    h1 = _leaky_relu(h1 + b1_ref[...])                       # (H, TB)

    # fc2: 64x64 @ (64, TB) — MXU.
    h2 = jnp.dot(w2_ref[...], h1, preferred_element_type=jnp.float32)
    h2 = _leaky_relu(h2 + b2_ref[...])                       # (H, TB)

    # fc3: (3, 64) @ (64, TB) — MXU; output stays lane-dense.
    h3 = jnp.dot(w3_ref[...], h2, preferred_element_type=jnp.float32)
    o_ref[...] = (h3 + b3_ref[...]).astype(o_ref.dtype)      # (OUT, TB)


def prepare_params(params):
    """One-time re-layout from PyTorch nn.Linear shapes into kernel layout.

    Weights keep their (out, in) orientation (kernel computes W @ x), biases
    become (out, 1) columns broadcast along the lane/batch axis.  Call once at
    init time, not per forward pass.
    """
    return {
        "w1": params["w1"],                      # (H, Z)
        "b1": params["b1"].reshape(H, 1),
        "w2": params["w2"],                      # (H, H)
        "b2": params["b2"].reshape(H, 1),
        "w3": params["w3"],                      # (OUT, H)
        "b3": params["b3"].reshape(OUT, 1),
    }


def generator_forward(x, kparams, *, block_b=512):
    """x: (B, Z) float32; kparams: output of prepare_params. Returns (B, OUT)."""
    B = x.shape[0]

    # Batch goes to the lane axis: pick a lane-aligned tile and pad B up to it.
    bb = min(block_b, _round_up(max(B, 1), 128))
    b_padded = _round_up(B, bb)
    num_tiles = b_padded // bb

    xt = x.T                                                   # (Z, B)
    if b_padded != B:
        xt = jnp.pad(xt, ((0, 0), (0, b_padded - B)))          # (Z, B_padded)

    const = lambda shape: pl.BlockSpec(shape, lambda i: tuple(0 for _ in shape))

    out_t = pl.pallas_call(
        generator_kernel,
        out_shape=jax.ShapeDtypeStruct((OUT, b_padded), jnp.float32),
        grid=(num_tiles,),
        in_specs=[
            pl.BlockSpec((Z, bb), lambda i: (0, i)),   # x tile (batch on lanes)
            const((H, Z)),                             # w1 — resident
            const((H, 1)),                             # b1
            const((H, H)),                             # w2
            const((H, 1)),                             # b2
            const((OUT, H)),                           # w3
            const((OUT, 1)),                           # b3
        ],
        out_specs=pl.BlockSpec((OUT, bb), lambda i: (0, i)),
        compiler_params=pltpu.CompilerParams(
            dimension_semantics=("parallel",),         # batch tiles split across TCs (v7x)
            vmem_limit_bytes=32 * 1024 * 1024,         # safe on v7x's 64-MiB VMEM
        ),
    )(xt, kparams["w1"], kparams["b1"], kparams["w2"], kparams["b2"],
      kparams["w3"], kparams["b3"])

    return out_t[:, :B].T                                      # (B, OUT)


def init_params(key):
    """Deterministic synthetic parameters with PyTorch nn.Linear shapes."""
    ks = jax.random.split(key, 6)

    def uniform(k, shape, fan_in):
        bound = 1.0 / jnp.sqrt(fan_in)
        return jax.random.uniform(k, shape, jnp.float32, -bound, bound)

    return {
        "w1": uniform(ks[0], (H, Z), Z),
        "b1": uniform(ks[1], (H,), Z),
        "w2": uniform(ks[2], (H, H), H),
        "b2": uniform(ks[3], (H,), H),
        "w3": uniform(ks[4], (OUT, H), H),
        "b3": uniform(ks[5], (OUT,), H),
    }


def reference_forward(x, params):
    h1 = _leaky_relu(x @ params["w1"].T + params["b1"])
    h2 = _leaky_relu(h1 @ params["w2"].T + params["b2"])
    return h2 @ params["w3"].T + params["b3"]


if __name__ == "__main__":
    key = jax.random.PRNGKey(0)
    kx, kp = jax.random.split(key)

    params = init_params(kp)
    kparams = prepare_params(params)   # one-time layout hoist

    fwd = jax.jit(generator_forward)

    # Small batch (B=8): single padded tile.
    B = 8
    x = jax.random.normal(kx, (B, Z), jnp.float32)
    out = jax.block_until_ready(fwd(x, kparams))
    ref = reference_forward(x, params)
    assert out.shape == (B, OUT)
    assert jnp.allclose(out, ref, atol=1e-5, rtol=1e-5), "mismatch vs reference (B=8)"

    # Larger, non-tile-aligned batch: exercises the multi-tile parallel grid + padding.
    B2 = 1032
    x2 = jax.random.normal(jax.random.fold_in(kx, 1), (B2, Z), jnp.float32)
    out2 = jax.block_until_ready(fwd(x2, kparams))
    ref2 = reference_forward(x2, params)
    assert out2.shape == (B2, OUT)
    assert jnp.allclose(out2, ref2, atol=1e-5, rtol=1e-5), "mismatch vs reference (B=1032)"

    print("KERNEL_OK")
</pallas_src>

<mosaic_0001>
module attributes {stable_mosaic.version = 11 : i64} {
  func.func @generator_kernel(%arg0: i32, %arg1: memref<3x128xf32, #tpu.memory_space<vmem>>, %arg2: memref<64x3xf32, #tpu.memory_space<vmem>>, %arg3: memref<64x1xf32, #tpu.memory_space<vmem>>, %arg4: memref<64x64xf32, #tpu.memory_space<vmem>>, %arg5: memref<64x1xf32, #tpu.memory_space<vmem>>, %arg6: memref<3x64xf32, #tpu.memory_space<vmem>>, %arg7: memref<3x1xf32, #tpu.memory_space<vmem>>, %arg8: memref<3x128xf32, #tpu.memory_space<vmem>>) attributes {dimension_semantics = [#tpu.dimension_semantics<parallel>], iteration_bounds = array<i64: 1>, scalar_prefetch = 0 : i64, scratch_operands = 0 : i64, tpu.core_type = #tpu.core_type<tc>, window_params = [{transform_indices = @transform_0, window_bounds = array<i64: 3, 128>}, {pipeline_mode = #tpu.pipeline_mode<synchronous>, transform_indices = @transform_1, window_bounds = array<i64: 64, 3>}, {pipeline_mode = #tpu.pipeline_mode<synchronous>, transform_indices = @transform_2, window_bounds = array<i64: 64, 1>}, {pipeline_mode = #tpu.pipeline_mode<synchronous>, transform_indices = @transform_3, window_bounds = array<i64: 64, 64>}, {pipeline_mode = #tpu.pipeline_mode<synchronous>, transform_indices = @transform_4, window_bounds = array<i64: 64, 1>}, {pipeline_mode = #tpu.pipeline_mode<synchronous>, transform_indices = @transform_5, window_bounds = array<i64: 3, 64>}, {pipeline_mode = #tpu.pipeline_mode<synchronous>, transform_indices = @transform_6, window_bounds = array<i64: 3, 1>}, {transform_indices = @transform_7, window_bounds = array<i64: 3, 128>}]} {
    %c0 = arith.constant 0 : index
    %c0_0 = arith.constant 0 : index
    %0 = vector.load %arg1[%c0, %c0_0] : memref<3x128xf32, #tpu.memory_space<vmem>>, vector<3x128xf32>
    %c0_1 = arith.constant 0 : index
    %c0_2 = arith.constant 0 : index
    %1 = vector.load %arg2[%c0_1, %c0_2] : memref<64x3xf32, #tpu.memory_space<vmem>>, vector<64x3xf32>
    %2 = vector.extract_strided_slice %1 {offsets = [0, 0], sizes = [64, 1], strides = [1, 1]} : vector<64x3xf32> to vector<64x1xf32>
    %3 = vector.extract_strided_slice %0 {offsets = [0, 0], sizes = [1, 128], strides = [1, 1]} : vector<3x128xf32> to vector<1x128xf32>
    %4 = vector.broadcast %2 : vector<64x1xf32> to vector<64x128xf32>
    %5 = vector.broadcast %3 : vector<1x128xf32> to vector<64x128xf32>
    %6 = arith.mulf %4, %5 : vector<64x128xf32>
    %7 = vector.extract_strided_slice %1 {offsets = [0, 1], sizes = [64, 1], strides = [1, 1]} : vector<64x3xf32> to vector<64x1xf32>
    %8 = vector.extract_strided_slice %0 {offsets = [1, 0], sizes = [1, 128], strides = [1, 1]} : vector<3x128xf32> to vector<1x128xf32>
    %9 = vector.broadcast %7 : vector<64x1xf32> to vector<64x128xf32>
    %10 = vector.broadcast %8 : vector<1x128xf32> to vector<64x128xf32>
    %11 = arith.mulf %9, %10 : vector<64x128xf32>
    %12 = arith.addf %6, %11 : vector<64x128xf32>
    %13 = vector.extract_strided_slice %1 {offsets = [0, 2], sizes = [64, 1], strides = [1, 1]} : vector<64x3xf32> to vector<64x1xf32>
    %14 = vector.extract_strided_slice %0 {offsets = [2, 0], sizes = [1, 128], strides = [1, 1]} : vector<3x128xf32> to vector<1x128xf32>
    %15 = vector.broadcast %13 : vector<64x1xf32> to vector<64x128xf32>
    %16 = vector.broadcast %14 : vector<1x128xf32> to vector<64x128xf32>
    %17 = arith.mulf %15, %16 : vector<64x128xf32>
    %18 = arith.addf %12, %17 : vector<64x128xf32>
    %c0_3 = arith.constant 0 : index
    %c0_4 = arith.constant 0 : index
    %19 = vector.load %arg3[%c0_3, %c0_4] : memref<64x1xf32, #tpu.memory_space<vmem>>, vector<64x1xf32>
    %20 = vector.broadcast %19 : vector<64x1xf32> to vector<64x128xf32>
    %21 = arith.addf %18, %20 : vector<64x128xf32>
    %cst = arith.constant 0.000000e+00 : f32
    %22 = vector.broadcast %cst : f32 to vector<64x128xf32>
    %23 = arith.cmpf oge, %21, %22 : vector<64x128xf32>
    %cst_5 = arith.constant 0.00999999977 : f32
    %24 = vector.broadcast %cst_5 : f32 to vector<64x128xf32>
    %25 = arith.mulf %24, %21 : vector<64x128xf32>
    %26 = arith.select %23, %21, %25 : vector<64x128xi1>, vector<64x128xf32>
    %c0_6 = arith.constant 0 : index
    %c0_7 = arith.constant 0 : index
    %27 = vector.load %arg4[%c0_6, %c0_7] : memref<64x64xf32, #tpu.memory_space<vmem>>, vector<64x64xf32>
    %cst_8 = arith.constant dense<0.000000e+00> : vector<64x128xf32>
    %28 = tpu.matmul %27, %26, %cst_8 {dimension_numbers = #tpu.dot_dimension_numbers<[1], [0], [0], [1], [0, 0, 1, 1], [], []>} : vector<64x64xf32>, vector<64x128xf32>, vector<64x128xf32> -> vector<64x128xf32>
    %c0_9 = arith.constant 0 : index
    %c0_10 = arith.constant 0 : index
    %29 = vector.load %arg5[%c0_9, %c0_10] : memref<64x1xf32, #tpu.memory_space<vmem>>, vector<64x1xf32>
    %30 = vector.broadcast %29 : vector<64x1xf32> to vector<64x128xf32>
    %31 = arith.addf %28, %30 : vector<64x128xf32>
    %cst_11 = arith.constant 0.000000e+00 : f32
    %32 = vector.broadcast %cst_11 : f32 to vector<64x128xf32>
    %33 = arith.cmpf oge, %31, %32 : vector<64x128xf32>
    %cst_12 = arith.constant 0.00999999977 : f32
    %34 = vector.broadcast %cst_12 : f32 to vector<64x128xf32>
    %35 = arith.mulf %34, %31 : vector<64x128xf32>
    %36 = arith.select %33, %31, %35 : vector<64x128xi1>, vector<64x128xf32>
    %c0_13 = arith.constant 0 : index
    %c0_14 = arith.constant 0 : index
    %37 = vector.load %arg6[%c0_13, %c0_14] : memref<3x64xf32, #tpu.memory_space<vmem>>, vector<3x64xf32>
    %cst_15 = arith.constant dense<0.000000e+00> : vector<3x128xf32>
    %38 = tpu.matmul %37, %36, %cst_15 {dimension_numbers = #tpu.dot_dimension_numbers<[1], [0], [0], [1], [0, 0, 1, 1], [], []>} : vector<3x64xf32>, vector<64x128xf32>, vector<3x128xf32> -> vector<3x128xf32>
    %c0_16 = arith.constant 0 : index
    %c0_17 = arith.constant 0 : index
    %39 = vector.load %arg7[%c0_16, %c0_17] : memref<3x1xf32, #tpu.memory_space<vmem>>, vector<3x1xf32>
    %40 = vector.broadcast %39 : vector<3x1xf32> to vector<3x128xf32>
    %41 = arith.addf %38, %40 : vector<3x128xf32>
    %c0_18 = arith.constant 0 : index
    %c0_19 = arith.constant 0 : index
    %42 = vector.load %arg8[%c0_18, %c0_19] : memref<3x128xf32, #tpu.memory_space<vmem>>, vector<3x128xf32>
    tpu.vector_store %arg8[%c0_18, %c0_19], %41 {strides = array<i32>} : memref<3x128xf32, #tpu.memory_space<vmem>>, vector<3x128xf32>,
    return
  }
  func.func @transform_0(%arg0: i32) -> (i32, i32) {
    %c0_i32 = arith.constant 0 : i32
    %c0_i32_0 = arith.constant 0 : i32
    return %c0_i32, %arg0 : i32, i32
  }
  func.func @transform_1(%arg0: i32) -> (i32, i32) {
    %c0_i32 = arith.constant 0 : i32
    %c0_i32_0 = arith.constant 0 : i32
    %c0_i32_1 = arith.constant 0 : i32
    return %c0_i32, %c0_i32_0 : i32, i32
  }
  func.func @transform_2(%arg0: i32) -> (i32, i32) {
    %c0_i32 = arith.constant 0 : i32
    %c0_i32_0 = arith.constant 0 : i32
    %c0_i32_1 = arith.constant 0 : i32
    return %c0_i32, %c0_i32_0 : i32, i32
  }
  func.func @transform_3(%arg0: i32) -> (i32, i32) {
    %c0_i32 = arith.constant 0 : i32
    %c0_i32_0 = arith.constant 0 : i32
    %c0_i32_1 = arith.constant 0 : i32
    return %c0_i32, %c0_i32_0 : i32, i32
  }
  func.func @transform_4(%arg0: i32) -> (i32, i32) {
    %c0_i32 = arith.constant 0 : i32
    %c0_i32_0 = arith.constant 0 : i32
    %c0_i32_1 = arith.constant 0 : i32
    return %c0_i32, %c0_i32_0 : i32, i32
  }
  func.func @transform_5(%arg0: i32) -> (i32, i32) {
    %c0_i32 = arith.constant 0 : i32
    %c0_i32_0 = arith.constant 0 : i32
    %c0_i32_1 = arith.constant 0 : i32
    return %c0_i32, %c0_i32_0 : i32, i32
  }
  func.func @transform_6(%arg0: i32) -> (i32, i32) {
    %c0_i32 = arith.constant 0 : i32
    %c0_i32_0 = arith.constant 0 : i32
    %c0_i32_1 = arith.constant 0 : i32
    return %c0_i32, %c0_i32_0 : i32, i32
  }
  func.func @transform_7(%arg0: i32) -> (i32, i32) {
    %c0_i32 = arith.constant 0 : i32
    %c0_i32_0 = arith.constant 0 : i32
    return %c0_i32, %arg0 : i32, i32
  }
}

</mosaic_0001>

<llo_original>
// kernel: generator_forward.1
$region0: #{generator_forward.1}
  #allocation0 [shape = 'u32[]', space=smem, size = 0x4, offset = 0x4, fixed_abs, tag = 'smem constant byte address 0x4 - core index']
  #allocation1 [shape = 'u32[72,128]{1,0:T(1,128)}', space=vmem, size = 0x9000, scoped, tag = 'internal scratch']
  %s0 = inlined_call_operand.vmem [shape: f32[3,128], index: 0, kind: input, shape index: {}]
  %s1 = inlined_call_operand.vmem [shape: f32[64,3], index: 1, kind: input, shape index: {}]
  %s2 = inlined_call_operand.vmem [shape: f32[64,1], index: 2, kind: input, shape index: {}]
  %s3 = inlined_call_operand.vmem [shape: f32[64,64], index: 3, kind: input, shape index: {}]
  %s4 = inlined_call_operand.vmem [shape: f32[64,1], index: 4, kind: input, shape index: {}]
  %s5 = inlined_call_operand.vmem [shape: f32[3,64], index: 5, kind: input, shape index: {}]
  %s6 = inlined_call_operand.vmem [shape: f32[3,1], index: 6, kind: input, shape index: {}]
  %s7 = inlined_call_operand.vmem [shape: f32[3,128], index: 7, kind: output, shape index: {}]
  %s8 = sld [smem:[#allocation0]]
  $region38: #{generator_forward.1} parent=0
    _
  %s10 = ssub.s32 1, %s8
  %s11 = scalar_select 0, %s10, %s8
  // Predicated region
  $region2: #{generator_forward.1} parent=0 // pred_check
    _
  $region3: #{generator_forward.1} parent=0 // pred_check_branch
    %13 = sbr.rel (0) target = $region5
  $region4: #{generator_forward.1} parent=0 // pred_region
    _
  $region5: #{generator_forward.1} parent=0 // pred_fallthru
    _
  // Predicated region
  $region6: #{generator_forward.1} parent=0 // pred_check
    _
  $region7: #{generator_forward.1} parent=0 // pred_check_branch
    %15 = sbr.rel (0) target = $region9
  $region8: #{generator_forward.1} parent=0 // pred_region
    _
  $region9: #{generator_forward.1} parent=0 // pred_fallthru
    _
  // Predicated region
  $region10: #{generator_forward.1} parent=0 // pred_check
    _
  $region11: #{generator_forward.1} parent=0 // pred_check_branch
    %17 = sbr.rel (0) target = $region13
  $region12: #{generator_forward.1} parent=0 // pred_region
    _
  $region13: #{generator_forward.1} parent=0 // pred_fallthru
    _
  // Predicated region
  $region14: #{generator_forward.1} parent=0 // pred_check
    _
  $region15: #{generator_forward.1} parent=0 // pred_check_branch
    %19 = sbr.rel (0) target = $region17
  $region16: #{generator_forward.1} parent=0 // pred_region
    _
  $region17: #{generator_forward.1} parent=0 // pred_fallthru
    _
  // Predicated region
  $region18: #{generator_forward.1} parent=0 // pred_check
    _
  $region19: #{generator_forward.1} parent=0 // pred_check_branch
    %21 = sbr.rel (0) target = $region21
  $region20: #{generator_forward.1} parent=0 // pred_region
    _
  $region21: #{generator_forward.1} parent=0 // pred_fallthru
    _
  // Predicated region
  $region22: #{generator_forward.1} parent=0 // pred_check
    _
  $region23: #{generator_forward.1} parent=0 // pred_check_branch
    %23 = sbr.rel (0) target = $region25
  $region24: #{generator_forward.1} parent=0 // pred_region
    _
  $region25: #{generator_forward.1} parent=0 // pred_fallthru
    _
  // Predicated region
  $region26: #{generator_forward.1} parent=0 // pred_check
    _
  $region27: #{generator_forward.1} parent=0 // pred_check_branch
    %25 = sbr.rel (0) target = $region29
  $region28: #{generator_forward.1} parent=0 // pred_region
    _
  $region29: #{generator_forward.1} parent=0 // pred_fallthru
    _
  %v26 = vld [vmem:[%s0] sm:$0x7]
  %v27 = vld [vmem:[%s1] sm:$0xff]
  %v28 = vld [vmem:[%s1 + $0x8] sm:$0xff]
  %v29 = vld [vmem:[%s1 + $0x10] sm:$0xff]
  %v30 = vld [vmem:[%s1 + $0x18] sm:$0xff]
  %v31 = vld [vmem:[%s1 + $0x20] sm:$0xff]
  %v32 = vld [vmem:[%s1 + $0x28] sm:$0xff]
  %v33 = vld [vmem:[%s1 + $0x30] sm:$0xff]
  %v34 = vld [vmem:[%s1 + $0x38] sm:$0xff]
  %36 = vset.pattern.permute.xlu0 0
  %37 = vperm.xlu0 %36, %v27
  %v38 = vpop.permute.xlu0 %37
  %41 = vset.pattern.permute.xlu0 0
  %42 = vperm.xlu0 %41, %v28
  %v43 = vpop.permute.xlu0 %42
  %46 = vset.pattern.permute.xlu0 0
  %47 = vperm.xlu0 %46, %v29
  %v48 = vpop.permute.xlu0 %47
  %51 = vset.pattern.permute.xlu0 0
  %52 = vperm.xlu0 %51, %v30
  %v53 = vpop.permute.xlu0 %52
  %56 = vset.pattern.permute.xlu0 0
  %57 = vperm.xlu0 %56, %v31
  %v58 = vpop.permute.xlu0 %57
  %61 = vset.pattern.permute.xlu0 0
  %62 = vperm.xlu0 %61, %v32
  %v63 = vpop.permute.xlu0 %62
  %66 = vset.pattern.permute.xlu0 0
  %67 = vperm.xlu0 %66, %v33
  %v68 = vpop.permute.xlu0 %67
  %71 = vset.pattern.permute.xlu0 0
  %72 = vperm.xlu0 %71, %v34
  %v73 = vpop.permute.xlu0 %72
  %v75 = vperm.slane %v26, 0
  %v76 = vmul.f32 %v38, %v75
  %v77 = vmul.f32 %v43, %v75
  %v78 = vmul.f32 %v48, %v75
  %v79 = vmul.f32 %v53, %v75
  %v80 = vmul.f32 %v58, %v75
  %v81 = vmul.f32 %v63, %v75
  %v82 = vmul.f32 %v68, %v75
  %v83 = vmul.f32 %v73, %v75
  %84 = vset.pattern.permute.xlu0 1
  %85 = vperm.xlu0 %84, %v27
  %v86 = vpop.permute.xlu0 %85
  %88 = vset.pattern.permute.xlu0 1
  %89 = vperm.xlu0 %88, %v28
  %v90 = vpop.permute.xlu0 %89
  %92 = vset.pattern.permute.xlu0 1
  %93 = vperm.xlu0 %92, %v29
  %v94 = vpop.permute.xlu0 %93
  %96 = vset.pattern.permute.xlu0 1
  %97 = vperm.xlu0 %96, %v30
  %v98 = vpop.permute.xlu0 %97
  %100 = vset.pattern.permute.xlu0 1
  %101 = vperm.xlu0 %100, %v31
  %v102 = vpop.permute.xlu0 %101
  %104 = vset.pattern.permute.xlu0 1
  %105 = vperm.xlu0 %104, %v32
  %v106 = vpop.permute.xlu0 %105
  %108 = vset.pattern.permute.xlu0 1
  %109 = vperm.xlu0 %108, %v33
  %v110 = vpop.permute.xlu0 %109
  %112 = vset.pattern.permute.xlu0 1
  %113 = vperm.xlu0 %112, %v34
  %v114 = vpop.permute.xlu0 %113
  %v116 = vperm.slane %v26, 1
  %v117 = vmul.f32 %v86, %v116
  %v118 = vmul.f32 %v90, %v116
  %v119 = vmul.f32 %v94, %v116
  %v120 = vmul.f32 %v98, %v116
  %v121 = vmul.f32 %v102, %v116
  %v122 = vmul.f32 %v106, %v116
  %v123 = vmul.f32 %v110, %v116
  %v124 = vmul.f32 %v114, %v116
  %v125 = vadd.f32 %v76, %v117
  %v126 = vadd.f32 %v77, %v118
  %v127 = vadd.f32 %v78, %v119
  %v128 = vadd.f32 %v79, %v120
  %v129 = vadd.f32 %v80, %v121
  %v130 = vadd.f32 %v81, %v122
  %v131 = vadd.f32 %v82, %v123
  %v132 = vadd.f32 %v83, %v124
  %133 = vset.pattern.permute.xlu0 2
  %134 = vperm.xlu0 %133, %v27
  %v135 = vpop.permute.xlu0 %134
  %137 = vset.pattern.permute.xlu0 2
  %138 = vperm.xlu0 %137, %v28
  %v139 = vpop.permute.xlu0 %138
  %141 = vset.pattern.permute.xlu0 2
  %142 = vperm.xlu0 %141, %v29
  %v143 = vpop.permute.xlu0 %142
  %145 = vset.pattern.permute.xlu0 2
  %146 = vperm.xlu0 %145, %v30
  %v147 = vpop.permute.xlu0 %146
  %149 = vset.pattern.permute.xlu0 2
  %150 = vperm.xlu0 %149, %v31
  %v151 = vpop.permute.xlu0 %150
  %153 = vset.pattern.permute.xlu0 2
  %154 = vperm.xlu0 %153, %v32
  %v155 = vpop.permute.xlu0 %154
  %157 = vset.pattern.permute.xlu0 2
  %158 = vperm.xlu0 %157, %v33
  %v159 = vpop.permute.xlu0 %158
  %161 = vset.pattern.permute.xlu0 2
  %162 = vperm.xlu0 %161, %v34
  %v163 = vpop.permute.xlu0 %162
  %v165 = vperm.slane %v26, 2
  %v166 = vmul.f32 %v135, %v165
  %v167 = vmul.f32 %v139, %v165
  %v168 = vmul.f32 %v143, %v165
  %v169 = vmul.f32 %v147, %v165
  %v170 = vmul.f32 %v151, %v165
  %v171 = vmul.f32 %v155, %v165
  %v172 = vmul.f32 %v159, %v165
  %v173 = vmul.f32 %v163, %v165
  %v174 = vadd.f32 %v125, %v166
  %v175 = vadd.f32 %v126, %v167
  %v176 = vadd.f32 %v127, %v168
  %v177 = vadd.f32 %v128, %v169
  %v178 = vadd.f32 %v129, %v170
  %v179 = vadd.f32 %v130, %v171
  %v180 = vadd.f32 %v131, %v172
  %v181 = vadd.f32 %v132, %v173
  %v182 = vld [vmem:[%s2] sm:$0xff]
  %v183 = vld [vmem:[%s2 + $0x8] sm:$0xff]
  %v184 = vld [vmem:[%s2 + $0x10] sm:$0xff]
  %v185 = vld [vmem:[%s2 + $0x18] sm:$0xff]
  %v186 = vld [vmem:[%s2 + $0x20] sm:$0xff]
  %v187 = vld [vmem:[%s2 + $0x28] sm:$0xff]
  %v188 = vld [vmem:[%s2 + $0x30] sm:$0xff]
  %v189 = vld [vmem:[%s2 + $0x38] sm:$0xff]
  %191 = vset.pattern.permute.xlu0 0
  %192 = vperm.xlu0 %191, %v182
  %v193 = vpop.permute.xlu0 %192
  %196 = vset.pattern.permute.xlu0 0
  %197 = vperm.xlu0 %196, %v183
  %v198 = vpop.permute.xlu0 %197
  %201 = vset.pattern.permute.xlu0 0
  %202 = vperm.xlu0 %201, %v184
  %v203 = vpop.permute.xlu0 %202
  %206 = vset.pattern.permute.xlu0 0
  %207 = vperm.xlu0 %206, %v185
  %v208 = vpop.permute.xlu0 %207
  %211 = vset.pattern.permute.xlu0 0
  %212 = vperm.xlu0 %211, %v186
  %v213 = vpop.permute.xlu0 %212
  %216 = vset.pattern.permute.xlu0 0
  %217 = vperm.xlu0 %216, %v187
  %v218 = vpop.permute.xlu0 %217
  %221 = vset.pattern.permute.xlu0 0
  %222 = vperm.xlu0 %221, %v188
  %v223 = vpop.permute.xlu0 %222
  %226 = vset.pattern.permute.xlu0 0
  %227 = vperm.xlu0 %226, %v189
  %v228 = vpop.permute.xlu0 %227
  %v230 = vadd.f32 %v174, %v193
  %v231 = vadd.f32 %v175, %v198
  %v232 = vadd.f32 %v176, %v203
  %v233 = vadd.f32 %v177, %v208
  %v234 = vadd.f32 %v178, %v213
  %v235 = vadd.f32 %v179, %v218
  %v236 = vadd.f32 %v180, %v223
  %v237 = vadd.f32 %v181, %v228
  %vm238 = vcmp.ge.f32.partialorder %v230, 0.0
  %vm239 = vcmp.ge.f32.partialorder %v231, 0.0
  %vm240 = vcmp.ge.f32.partialorder %v232, 0.0
  %vm241 = vcmp.ge.f32.partialorder %v233, 0.0
  %vm242 = vcmp.ge.f32.partialorder %v234, 0.0
  %vm243 = vcmp.ge.f32.partialorder %v235, 0.0
  %vm244 = vcmp.ge.f32.partialorder %v236, 0.0
  %vm245 = vcmp.ge.f32.partialorder %v237, 0.0
  %v246 = vmul.f32 %v230, 0.01
  %v247 = vmul.f32 %v231, 0.01
  %v248 = vmul.f32 %v232, 0.01
  %v249 = vmul.f32 %v233, 0.01
  %v250 = vmul.f32 %v234, 0.01
  %v251 = vmul.f32 %v235, 0.01
  %v252 = vmul.f32 %v236, 0.01
  %v253 = vmul.f32 %v237, 0.01
  %v254 = vsel %vm238, %v230, %v246
  %v255 = vsel %vm239, %v231, %v247
  %v256 = vsel %vm240, %v232, %v248
  %v257 = vsel %vm241, %v233, %v249
  %v258 = vsel %vm242, %v234, %v250
  %v259 = vsel %vm243, %v235, %v251
  %v260 = vsel %vm244, %v236, %v252
  %v261 = vsel %vm245, %v237, %v253
  %v262 = vld [vmem:[%s3] sm:$0xff]
  %v263 = vld [vmem:[%s3 + $0x8] sm:$0xff]
  %v264 = vld [vmem:[%s3 + $0x10] sm:$0xff]
  %v265 = vld [vmem:[%s3 + $0x18] sm:$0xff]
  %v266 = vld [vmem:[%s3 + $0x20] sm:$0xff]
  %v267 = vld [vmem:[%s3 + $0x28] sm:$0xff]
  %v268 = vld [vmem:[%s3 + $0x30] sm:$0xff]
  %v269 = vld [vmem:[%s3 + $0x38] sm:$0xff]
  %v270 = vld [vmem:[%s4] sm:$0xff]
  %v271 = vld [vmem:[%s4 + $0x8] sm:$0xff]
  %v272 = vld [vmem:[%s4 + $0x10] sm:$0xff]
  %v273 = vld [vmem:[%s4 + $0x18] sm:$0xff]
  %v274 = vld [vmem:[%s4 + $0x20] sm:$0xff]
  %v275 = vld [vmem:[%s4 + $0x28] sm:$0xff]
  %v276 = vld [vmem:[%s4 + $0x30] sm:$0xff]
  %v277 = vld [vmem:[%s4 + $0x38] sm:$0xff]
  %279 = vset.pattern.permute.xlu0 0
  %280 = vperm.xlu0 %279, %v270
  %v281 = vpop.permute.xlu0 %280
  %284 = vset.pattern.permute.xlu0 0
  %285 = vperm.xlu0 %284, %v271
  %v286 = vpop.permute.xlu0 %285
  %289 = vset.pattern.permute.xlu0 0
  %290 = vperm.xlu0 %289, %v272
  %v291 = vpop.permute.xlu0 %290
  %294 = vset.pattern.permute.xlu0 0
  %295 = vperm.xlu0 %294, %v273
  %v296 = vpop.permute.xlu0 %295
  %299 = vset.pattern.permute.xlu0 0
  %300 = vperm.xlu0 %299, %v274
  %v301 = vpop.permute.xlu0 %300
  %304 = vset.pattern.permute.xlu0 0
  %305 = vperm.xlu0 %304, %v275
  %v306 = vpop.permute.xlu0 %305
  %309 = vset.pattern.permute.xlu0 0
  %310 = vperm.xlu0 %309, %v276
  %v311 = vpop.permute.xlu0 %310
  %314 = vset.pattern.permute.xlu0 0
  %315 = vperm.xlu0 %314, %v277
  %v316 = vpop.permute.xlu0 %315
  %vm318 = vcmask 523264
  %v320 = vsel %vm318, %v262, 0
  %v323 = vsel %vm318, %v263, 0
  %v326 = vsel %vm318, %v264, 0
  %v329 = vsel %vm318, %v265, 0
  %v332 = vsel %vm318, %v266, 0
  %v335 = vsel %vm318, %v267, 0
  %v338 = vsel %vm318, %v268, 0
  %v341 = vsel %vm318, %v269, 0
  %343 = vmatpush.msra.mxu0 0.0
  %344 = vmatpush.msra.mxu0 0.0
  %345 = vmatpush.msra.mxu0 0.0
  %346 = vmatpush.msra.mxu0 0.0
  %347 = vmatpush.msra.mxu0 0.0
  %348 = vmatpush.msra.mxu0 0.0
  %349 = vmatpush.msra.mxu0 0.0
  %350 = vmatpush.msra.mxu0 0.0
  %351 = vmatpush.msra.mxu0 %v261
  %352 = vmatpush.msra.mxu0 %v260
  %353 = vmatpush.msra.mxu0 %v259
  %354 = vmatpush.msra.mxu0 %v258
  %355 = vmatpush.msra.mxu0 %v257
  %356 = vmatpush.msra.mxu0 %v256
  %357 = vmatpush.msra.mxu0 %v255
  %358 = vmatpush.msra.mxu0 %v254
  %359 = vmatmul.f32.gmra.mxu0 %v320
  %v360 = vpop.f32.mrf.mxu0
  %v361 = vadd.f32 %v281, %v360
  %362 = vmatmul.f32.gmra.mxu0 %v323
  %v363 = vpop.f32.mrf.mxu0
  %v364 = vadd.f32 %v286, %v363
  %365 = vmatmul.f32.gmra.mxu0 %v326
  %v366 = vpop.f32.mrf.mxu0
  %v367 = vadd.f32 %v291, %v366
  %368 = vmatmul.f32.gmra.mxu0 %v329
  %v369 = vpop.f32.mrf.mxu0
  %v370 = vadd.f32 %v296, %v369
  %371 = vmatmul.f32.gmra.mxu0 %v332
  %v372 = vpop.f32.mrf.mxu0
  %v373 = vadd.f32 %v301, %v372
  %374 = vmatmul.f32.gmra.mxu0 %v335
  %v375 = vpop.f32.mrf.mxu0
  %v376 = vadd.f32 %v306, %v375
  %377 = vmatmul.f32.gmra.mxu0 %v338
  %v378 = vpop.f32.mrf.mxu0
  %v379 = vadd.f32 %v311, %v378
  %380 = vmatmul.f32.gmra.mxu0 %v341
  %v381 = vpop.f32.mrf.mxu0
  %v382 = vadd.f32 %v316, %v381
  %383 = vdwg.mxu0
  %vm384 = vcmp.ge.f32.partialorder %v361, 0.0
  %vm385 = vcmp.ge.f32.partialorder %v364, 0.0
  %vm386 = vcmp.ge.f32.partialorder %v367, 0.0
  %vm387 = vcmp.ge.f32.partialorder %v370, 0.0
  %vm388 = vcmp.ge.f32.partialorder %v373, 0.0
  %vm389 = vcmp.ge.f32.partialorder %v376, 0.0
  %vm390 = vcmp.ge.f32.partialorder %v379, 0.0
  %vm391 = vcmp.ge.f32.partialorder %v382, 0.0
  %v392 = vmul.f32 %v361, 0.01
  %v393 = vmul.f32 %v364, 0.01
  %v394 = vmul.f32 %v367, 0.01
  %v395 = vmul.f32 %v370, 0.01
  %v396 = vmul.f32 %v373, 0.01
  %v397 = vmul.f32 %v376, 0.01
  %v398 = vmul.f32 %v379, 0.01
  %v399 = vmul.f32 %v382, 0.01
  %v400 = vsel %vm384, %v361, %v392
  %v401 = vsel %vm385, %v364, %v393
  %v402 = vsel %vm386, %v367, %v394
  %v403 = vsel %vm387, %v370, %v395
  %v404 = vsel %vm388, %v373, %v396
  %v405 = vsel %vm389, %v376, %v397
  %v406 = vsel %vm390, %v379, %v398
  %v407 = vsel %vm391, %v382, %v399
  %v408 = vld [vmem:[%s5] sm:$0x7]
  %v409 = vld [vmem:[%s6] sm:$0x7]
  %411 = vset.pattern.permute.xlu0 0
  %412 = vperm.xlu0 %411, %v409
  %v413 = vpop.permute.xlu0 %412
  %v416 = vsel %vm318, %v408, 0
  %418 = vmatpush.msra.mxu0 0.0
  %419 = vmatpush.msra.mxu0 0.0
  %420 = vmatpush.msra.mxu0 0.0
  %421 = vmatpush.msra.mxu0 0.0
  %422 = vmatpush.msra.mxu0 0.0
  %423 = vmatpush.msra.mxu0 0.0
  %424 = vmatpush.msra.mxu0 0.0
  %425 = vmatpush.msra.mxu0 0.0
  %426 = vmatpush.msra.mxu0 %v407
  %427 = vmatpush.msra.mxu0 %v406
  %428 = vmatpush.msra.mxu0 %v405
  %429 = vmatpush.msra.mxu0 %v404
  %430 = vmatpush.msra.mxu0 %v403
  %431 = vmatpush.msra.mxu0 %v402
  %432 = vmatpush.msra.mxu0 %v401
  %433 = vmatpush.msra.mxu0 %v400
  %434 = vmatmul.f32.gmra.mxu0 %v416
  %v435 = vpop.f32.mrf.mxu0
  %v436 = vadd.f32 %v413, %v435
  %437 = vdwg.mxu0
  %438 = vst [vmem:[%s7] sm:$0x7] %v436
  // Predicated region
  $region30: #{generator_forward.1} parent=0 // pred_check
    _
  $region31: #{generator_forward.1} parent=0 // pred_check_branch
    %440 = sbr.rel (0) target = $region33
  $region32: #{generator_forward.1} parent=0 // pred_region
    _
  $region33: #{generator_forward.1} parent=0 // pred_fallthru
    _
  // Predicated region
  $region34: #{generator_forward.1} parent=0 // pred_check
    _
  $region35: #{generator_forward.1} parent=0 // pred_check_branch
    %442 = sbr.rel (0) target = $region37
  $region36: #{generator_forward.1} parent=0 // pred_region
    _
  $region37: #{generator_forward.1} parent=0 // pred_fallthru
    _

</llo_original>
